<compile_context>
chip_gen: v7x
topology: tpu7x:2x2x1
jax: 0.10.0
libtpu: 0.0.40
codegen_flags: <defaults>
</compile_context>

<pallas_src>
import functools

import numpy as np
import jax
import jax.numpy as jnp
from jax.experimental import pallas as pl
from jax.experimental.pallas import tpu as pltpu


# ----------------------------------------------------------------------------
# Deterministic host-side parameter construction (numpy, mirrors the module).
# ----------------------------------------------------------------------------
def _hann_periodic(n):
    # == scipy.signal.get_window('hann', n, fftbins=True)
    return 0.5 - 0.5 * np.cos(2.0 * np.pi * np.arange(n) / n)


def make_fourier_kernels(n_fft):
    """create_fourier_kernels(..., freq_bins=None, freq_scale='no', window='hann')."""
    freq_bins = n_fft // 2 + 1
    s = np.arange(n_fft, dtype=np.float64)
    win = _hann_periodic(n_fft)
    k = np.arange(freq_bins, dtype=np.float64)[:, None]          # (F, 1)
    phase = 2.0 * np.pi * k * s[None, :] / n_fft                 # (F, n_fft)
    wsin = (win[None, :] * np.sin(phase)).astype(np.float32)
    wcos = (win[None, :] * np.cos(phase)).astype(np.float32)
    return wsin, wcos                                            # (F, n_fft) each


def _hz_to_mel(freqs):
    freqs = np.asanyarray(freqs, dtype=np.float64)
    f_sp = 200.0 / 3.0
    mels = freqs / f_sp
    min_log_hz = 1000.0
    min_log_mel = min_log_hz / f_sp
    logstep = np.log(6.4) / 27.0
    return np.where(freqs >= min_log_hz,
                    min_log_mel + np.log(np.maximum(freqs, min_log_hz) / min_log_hz) / logstep,
                    mels)


def _mel_to_hz(mels):
    mels = np.asanyarray(mels, dtype=np.float64)
    f_sp = 200.0 / 3.0
    freqs = f_sp * mels
    min_log_hz = 1000.0
    min_log_mel = min_log_hz / f_sp
    logstep = np.log(6.4) / 27.0
    return np.where(mels >= min_log_mel,
                    min_log_hz * np.exp(logstep * (mels - min_log_mel)),
                    freqs)


def make_mel_basis(sr, n_fft, n_mels, fmin=0.0, fmax=None, norm=1):
    """librosa-style mel filterbank (Slaney, area-normalized)."""
    if fmax is None:
        fmax = float(sr) / 2.0
    n_freqs = 1 + n_fft // 2
    fftfreqs = np.linspace(0.0, float(sr) / 2.0, n_freqs, endpoint=True)
    mel_f = _mel_to_hz(np.linspace(_hz_to_mel(fmin), _hz_to_mel(fmax), n_mels + 2))
    fdiff = np.diff(mel_f)
    ramps = np.subtract.outer(mel_f, fftfreqs)
    weights = np.zeros((n_mels, n_freqs), dtype=np.float64)
    for i in range(n_mels):
        lower = -ramps[i] / fdiff[i]
        upper = ramps[i + 2] / fdiff[i + 1]
        weights[i] = np.maximum(0.0, np.minimum(lower, upper))
    if norm == 1:
        enorm = 2.0 / (mel_f[2:n_mels + 2] - mel_f[:n_mels])
        weights *= enorm[:, np.newaxis]
    return weights.astype(np.float32)                            # (n_mels, F)


# ----------------------------------------------------------------------------
# Hardware-dependent defaults (safe fallbacks if queries fail).
# ----------------------------------------------------------------------------
def _default_frames_per_tile():
    try:
        kind = jax.devices()[0].device_kind.lower()
    except Exception:
        return 128
    # v5e (and older) MXU is 128-wide in N -> 128 saturates it; v6e/v7x are 256-wide.
    if any(v in kind for v in ("v2", "v3", "v4", "v5")):
        return 128
    return 256


def _pick_vmem_limit_bytes():
    try:
        cap = pltpu.get_tpu_info().vmem_capacity_bytes
        return min(int(cap * 0.85), 100 * 1024 * 1024)
    except Exception:
        return 48 * 1024 * 1024      # conservative: fits under v7x's 64 MiB


# ----------------------------------------------------------------------------
# Pallas kernel.
# ----------------------------------------------------------------------------
def _melspec_kernel(wcat_ref, mel_ref, sig_ref, out_ref, frames_ref, *,
                    f_pad, n_chunks, frames_per_tile, hop):
    """One (batch, frame-tile) grid step.

    wcat_ref   : (2*F_pad, n_fft)      fused [wsin; wcos] weights (resident)
    mel_ref    : (M_pad, F_pad)        mel filterbank (resident)
    sig_ref    : (rows_pad, hop)       per-(b, t) halo tile of hop-sized rows
    out_ref    : (M_pad, T_H) f32      mel spectrogram tile (torch layout)
    frames_ref : (T_H, n_fft) scratch  assembled frame tile
    """
    # Assemble the (T_H, n_fft) frame tile with R cheap shifted copies; frame t
    # of this tile is rows [t, t+R) of the halo slab.  The single K=n_fft
    # matmul below then accumulates inside the MXU (no f32 acc add chain).
    for r in range(n_chunks):                       # static, small (n_fft // hop)
        frames_ref[:, r * hop:(r + 1) * hop] = sig_ref[r:r + frames_per_tile, :]

    # (2*F_pad, K) x (T_H, K) contracting the lane dim of both (A @ B.T), the
    # same native MXU pattern as flash-attention q.k^T.
    acc = jax.lax.dot_general(
        wcat_ref[...], frames_ref[...],
        dimension_numbers=(((1,), (1,)), ((), ())),
        preferred_element_type=jnp.float32)                        # (2*F_pad, T_H)

    sin_part = acc[:f_pad, :]
    cos_part = acc[f_pad:, :]
    spec = sin_part * sin_part + cos_part * cos_part               # (F_pad, T_H) f32

    out_ref[...] = jnp.dot(mel_ref[...], spec.astype(mel_ref.dtype),
                           preferred_element_type=jnp.float32)     # (M_pad, T_H)


def melspectrogram_pallas(x, wsin, wcos, mel_basis, *, n_fft, hop_length,
                          center=True, pad_mode="reflect",
                          frames_per_tile=None, compute_dtype=jnp.bfloat16):
    """x: (B, L) or (L,) float32 -> melspec (B, n_mels, T) float32."""
    if x.ndim == 1:
        x = x[None, :]
    elif x.ndim == 3 and x.shape[1] == 1:
        x = x[:, 0, :]
    assert x.ndim == 2
    B, _ = x.shape
    F, K = wsin.shape
    n_mels = mel_basis.shape[0]
    assert K == n_fft
    assert n_fft % hop_length == 0, "this kernel requires hop_length | n_fft"
    R = n_fft // hop_length

    if frames_per_tile is None:
        frames_per_tile = _default_frames_per_tile()
    T_H = frames_per_tile
    assert T_H % 128 == 0, "frames_per_tile must be a multiple of 128"

    # --- host glue: center padding (matches torch ReflectionPad1d) ------------
    if center:
        pad = n_fft // 2
        mode = "reflect" if pad_mode == "reflect" else "constant"
        xp = jnp.pad(x, ((0, 0), (pad, pad)), mode=mode)
    else:
        xp = x
    Lp = xp.shape[1]
    T = (Lp - n_fft) // hop_length + 1
    assert T >= 1

    n_tiles = -(-T // T_H)
    T_round = n_tiles * T_H

    # Hop-sized rows; frame t is rows[t : t + R].  Tile along the frame axis
    # with a (T_H + R - 1)-row halo (rounded to a sublane multiple) so each
    # grid step only holds a small slab, independent of clip length.
    rows_per_tile = -(-(T_H + R - 1) // 8) * 8
    n_rows_needed = (n_tiles - 1) * T_H + rows_per_tile
    total = n_rows_needed * hop_length
    if total > Lp:
        xp = jnp.pad(xp, ((0, 0), (0, total - Lp)))
    else:
        xp = xp[:, :total]                      # drops only samples past the last frame
    sig_rows = xp.astype(compute_dtype).reshape(B, n_rows_needed, hop_length)
    row_idx = (np.arange(n_tiles)[:, None] * T_H
               + np.arange(rows_per_tile)[None, :])                 # (n_tiles, rows_pad)
    sig_tiles = jnp.take(sig_rows, jnp.asarray(row_idx), axis=1)    # (B, nt, rows_pad, hop)

    # Fuse [wsin; wcos] into one weight, pad F and n_mels to sublane multiples.
    F_pad = -(-F // 8) * 8
    M_pad = -(-n_mels // 8) * 8
    wcat = jnp.zeros((2 * F_pad, n_fft), jnp.float32)
    wcat = wcat.at[:F, :].set(jnp.asarray(wsin, jnp.float32))
    wcat = wcat.at[F_pad:F_pad + F, :].set(jnp.asarray(wcos, jnp.float32))
    wcat = wcat.astype(compute_dtype)
    mel_pad = jnp.zeros((M_pad, F_pad), jnp.float32).at[:n_mels, :F].set(
        jnp.asarray(mel_basis, jnp.float32)).astype(compute_dtype)

    kernel = functools.partial(_melspec_kernel, f_pad=F_pad, n_chunks=R,
                               frames_per_tile=T_H, hop=hop_length)

    out = pl.pallas_call(
        kernel,
        out_shape=jax.ShapeDtypeStruct((B, M_pad, T_round), jnp.float32),
        grid=(B, n_tiles),
        in_specs=[
            # Weights / mel basis: constant block index -> DMA'd once, resident,
            # single-buffered (double-buffering a constant block is pure VMEM waste).
            pl.BlockSpec((2 * F_pad, n_fft), lambda b, t: (0, 0),
                         pipeline_mode=pl.Buffered(1)),
            pl.BlockSpec((M_pad, F_pad), lambda b, t: (0, 0),
                         pipeline_mode=pl.Buffered(1)),
            # Per-(batch, frame-tile) halo slab: small, pipelined per step.
            pl.BlockSpec((None, None, rows_per_tile, hop_length),
                         lambda b, t: (b, t, 0, 0)),
        ],
        # Write directly in torch (B, n_mels, T) layout, lane-dense along T.
        out_specs=pl.BlockSpec((None, M_pad, T_H), lambda b, t: (b, 0, t)),
        scratch_shapes=[pltpu.VMEM((T_H, n_fft), compute_dtype)],
        compiler_params=pltpu.CompilerParams(
            dimension_semantics=("parallel", "parallel"),
            vmem_limit_bytes=_pick_vmem_limit_bytes()),
    )(wcat, mel_pad, sig_tiles)

    return out[:, :n_mels, :T]


# ----------------------------------------------------------------------------
# Pure numpy reference (direct transcription of the torch forward).
# ----------------------------------------------------------------------------
def melspectrogram_ref(x, wsin, wcos, mel_basis, *, n_fft, hop_length, center=True):
    x = np.asarray(x, np.float64)
    if x.ndim == 1:
        x = x[None, :]
    if center:
        x = np.pad(x, ((0, 0), (n_fft // 2, n_fft // 2)), mode="reflect")
    Lp = x.shape[1]
    T = (Lp - n_fft) // hop_length + 1
    frames = np.stack([x[:, t * hop_length:t * hop_length + n_fft]
                       for t in range(T)], axis=1)               # (B, T, n_fft)
    s = np.einsum("fk,btk->bft", wsin.astype(np.float64), frames)
    c = np.einsum("fk,btk->bft", wcos.astype(np.float64), frames)
    spec = s * s + c * c
    return np.einsum("mf,bft->bmt", mel_basis.astype(np.float64), spec)


if __name__ == "__main__":
    # Small shapes consistent with the module (defaults are n_fft=2048, hop=512,
    # n_mels=128; here scaled down with the same structure, hop | n_fft).
    sr = 22050
    n_fft = 64
    hop = 16
    n_mels = 32
    B = 2
    T_frames = 256
    L = (T_frames - 1) * hop            # 4080 samples -> exactly 256 frames

    wsin_np, wcos_np = make_fourier_kernels(n_fft)        # (33, 64)
    mel_np = make_mel_basis(sr, n_fft, n_mels)            # (32, 33)

    key = jax.random.PRNGKey(0)
    x = jax.random.normal(key, (B, L), dtype=jnp.float32)

    ref = melspectrogram_ref(np.asarray(x), wsin_np, wcos_np, mel_np,
                             n_fft=n_fft, hop_length=hop)

    # f32 path: tight(ish) check so layout / accumulation regressions aren't masked.
    out_f32 = melspectrogram_pallas(
        x, jnp.asarray(wsin_np), jnp.asarray(wcos_np), jnp.asarray(mel_np),
        n_fft=n_fft, hop_length=hop, compute_dtype=jnp.float32)
    jax.block_until_ready(out_f32)
    assert out_f32.shape == (B, n_mels, T_frames), out_f32.shape
    np.testing.assert_allclose(np.asarray(out_f32), ref, rtol=1e-2, atol=1e-3)

    # Production path: bf16 MXU operands (f32 accumulation). Looser tolerance
    # accommodates the bf16 quantization of weights/signal vs the f64 reference.
    out_bf16 = melspectrogram_pallas(
        x, jnp.asarray(wsin_np), jnp.asarray(wcos_np), jnp.asarray(mel_np),
        n_fft=n_fft, hop_length=hop, compute_dtype=jnp.bfloat16)
    jax.block_until_ready(out_bf16)
    assert out_bf16.shape == (B, n_mels, T_frames), out_bf16.shape
    np.testing.assert_allclose(np.asarray(out_bf16), ref, rtol=2e-2, atol=1e-2)

    print("KERNEL_OK")
</pallas_src>

<mosaic_0001>
module attributes {stable_mosaic.version = 11 : i64} {
  func.func @_melspec_kernel(%arg0: i32, %arg1: i32, %arg2: memref<80x64xf32, #tpu.memory_space<vmem>>, %arg3: memref<32x40xf32, #tpu.memory_space<vmem>>, %arg4: memref<1x1x264x16xf32, #tpu.memory_space<vmem>>, %arg5: memref<1x32x256xf32, #tpu.memory_space<vmem>>, %arg6: memref<256x64xf32, #tpu.memory_space<vmem>>) attributes {dimension_semantics = [#tpu.dimension_semantics<parallel>, #tpu.dimension_semantics<parallel>], iteration_bounds = array<i64: 2, 1>, scalar_prefetch = 0 : i64, scratch_operands = 1 : i64, tpu.core_type = #tpu.core_type<tc>, window_params = [{pipeline_mode = #tpu.pipeline_mode<synchronous>, transform_indices = @transform_0, window_bounds = array<i64: 80, 64>}, {pipeline_mode = #tpu.pipeline_mode<synchronous>, transform_indices = @transform_1, window_bounds = array<i64: 32, 40>}, {transform_indices = @transform_2, window_bounds = array<i64: 1, 1, 264, 16>}, {transform_indices = @transform_3, window_bounds = array<i64: 1, 32, 256>}]} {
    %c0 = arith.constant 0 : index
    %c0_0 = arith.constant 0 : index
    %c0_1 = arith.constant 0 : index
    %c0_2 = arith.constant 0 : index
    %0 = vector.load %arg4[%c0, %c0_0, %c0_1, %c0_2] : memref<1x1x264x16xf32, #tpu.memory_space<vmem>>, vector<1x1x256x16xf32>
    %1 = vector.shape_cast %0 : vector<1x1x256x16xf32> to vector<256x16xf32>
    %c0_3 = arith.constant 0 : index
    %c0_4 = arith.constant 0 : index
    %2 = vector.load %arg6[%c0_3, %c0_4] : memref<256x64xf32, #tpu.memory_space<vmem>>, vector<256x16xf32>
    tpu.vector_store %arg6[%c0_3, %c0_4], %1 {strides = array<i32>} : memref<256x64xf32, #tpu.memory_space<vmem>>, vector<256x16xf32>,
    %c0_5 = arith.constant 0 : index
    %c0_6 = arith.constant 0 : index
    %c1 = arith.constant 1 : index
    %c0_7 = arith.constant 0 : index
    %3 = vector.load %arg4[%c0_5, %c0_6, %c1, %c0_7] : memref<1x1x264x16xf32, #tpu.memory_space<vmem>>, vector<1x1x256x16xf32>
    %4 = vector.shape_cast %3 : vector<1x1x256x16xf32> to vector<256x16xf32>
    %c0_8 = arith.constant 0 : index
    %c16 = arith.constant 16 : index
    %5 = vector.load %arg6[%c0_8, %c16] : memref<256x64xf32, #tpu.memory_space<vmem>>, vector<256x16xf32>
    tpu.vector_store %arg6[%c0_8, %c16], %4 {strides = array<i32>} : memref<256x64xf32, #tpu.memory_space<vmem>>, vector<256x16xf32>,
    %c0_9 = arith.constant 0 : index
    %c0_10 = arith.constant 0 : index
    %c2 = arith.constant 2 : index
    %c0_11 = arith.constant 0 : index
    %6 = vector.load %arg4[%c0_9, %c0_10, %c2, %c0_11] : memref<1x1x264x16xf32, #tpu.memory_space<vmem>>, vector<1x1x256x16xf32>
    %7 = vector.shape_cast %6 : vector<1x1x256x16xf32> to vector<256x16xf32>
    %c0_12 = arith.constant 0 : index
    %c32 = arith.constant 32 : index
    %8 = vector.load %arg6[%c0_12, %c32] : memref<256x64xf32, #tpu.memory_space<vmem>>, vector<256x16xf32>
    tpu.vector_store %arg6[%c0_12, %c32], %7 {strides = array<i32>} : memref<256x64xf32, #tpu.memory_space<vmem>>, vector<256x16xf32>,
    %c0_13 = arith.constant 0 : index
    %c0_14 = arith.constant 0 : index
    %c3 = arith.constant 3 : index
    %c0_15 = arith.constant 0 : index
    %9 = vector.load %arg4[%c0_13, %c0_14, %c3, %c0_15] : memref<1x1x264x16xf32, #tpu.memory_space<vmem>>, vector<1x1x256x16xf32>
    %10 = vector.shape_cast %9 : vector<1x1x256x16xf32> to vector<256x16xf32>
    %c0_16 = arith.constant 0 : index
    %c48 = arith.constant 48 : index
    %11 = vector.load %arg6[%c0_16, %c48] : memref<256x64xf32, #tpu.memory_space<vmem>>, vector<256x16xf32>
    tpu.vector_store %arg6[%c0_16, %c48], %10 {strides = array<i32>} : memref<256x64xf32, #tpu.memory_space<vmem>>, vector<256x16xf32>,
    %c0_17 = arith.constant 0 : index
    %c0_18 = arith.constant 0 : index
    %12 = vector.load %arg2[%c0_17, %c0_18] : memref<80x64xf32, #tpu.memory_space<vmem>>, vector<80x64xf32>
    %c0_19 = arith.constant 0 : index
    %c0_20 = arith.constant 0 : index
    %13 = vector.load %arg6[%c0_19, %c0_20] : memref<256x64xf32, #tpu.memory_space<vmem>>, vector<256x64xf32>
    %cst = arith.constant dense<0.000000e+00> : vector<80x256xf32>
    %14 = tpu.matmul %12, %13, %cst {dimension_numbers = #tpu.dot_dimension_numbers<[1], [1], [0], [0], [0, 0, 1, 0], [], []>} : vector<80x64xf32>, vector<256x64xf32>, vector<80x256xf32> -> vector<80x256xf32>
    %15 = vector.extract_strided_slice %14 {offsets = [0, 0], sizes = [40, 256], strides = [1, 1]} : vector<80x256xf32> to vector<40x256xf32>
    %16 = vector.extract_strided_slice %14 {offsets = [40, 0], sizes = [40, 256], strides = [1, 1]} : vector<80x256xf32> to vector<40x256xf32>
    %17 = arith.mulf %15, %15 : vector<40x256xf32>
    %18 = arith.mulf %16, %16 : vector<40x256xf32>
    %19 = arith.addf %17, %18 : vector<40x256xf32>
    %c0_21 = arith.constant 0 : index
    %c0_22 = arith.constant 0 : index
    %20 = vector.load %arg3[%c0_21, %c0_22] : memref<32x40xf32, #tpu.memory_space<vmem>>, vector<32x40xf32>
    %cst_23 = arith.constant dense<0.000000e+00> : vector<32x256xf32>
    %21 = tpu.matmul %20, %19, %cst_23 {dimension_numbers = #tpu.dot_dimension_numbers<[1], [0], [0], [1], [0, 0, 1, 1], [], []>} : vector<32x40xf32>, vector<40x256xf32>, vector<32x256xf32> -> vector<32x256xf32>
    %c0_24 = arith.constant 0 : index
    %c0_25 = arith.constant 0 : index
    %c0_26 = arith.constant 0 : index
    %22 = vector.load %arg5[%c0_24, %c0_25, %c0_26] : memref<1x32x256xf32, #tpu.memory_space<vmem>>, vector<1x32x256xf32>
    %23 = vector.shape_cast %22 : vector<1x32x256xf32> to vector<32x256xf32>
    %24 = vector.shape_cast %21 : vector<32x256xf32> to vector<1x32x256xf32>
    tpu.vector_store %arg5[%c0_24, %c0_25, %c0_26], %24 {strides = array<i32>} : memref<1x32x256xf32, #tpu.memory_space<vmem>>, vector<1x32x256xf32>,
    return
  }
  func.func @transform_0(%arg0: i32, %arg1: i32) -> (i32, i32) {
    %c0_i32 = arith.constant 0 : i32
    %c0_i32_0 = arith.constant 0 : i32
    %c0_i32_1 = arith.constant 0 : i32
    return %c0_i32, %c0_i32_0 : i32, i32
  }
  func.func @transform_1(%arg0: i32, %arg1: i32) -> (i32, i32) {
    %c0_i32 = arith.constant 0 : i32
    %c0_i32_0 = arith.constant 0 : i32
    %c0_i32_1 = arith.constant 0 : i32
    return %c0_i32, %c0_i32_0 : i32, i32
  }
  func.func @transform_2(%arg0: i32, %arg1: i32) -> (i32, i32, i32, i32) {
    %c0_i32 = arith.constant 0 : i32
    %c0_i32_0 = arith.constant 0 : i32
    %c0_i32_1 = arith.constant 0 : i32
    return %arg0, %arg1, %c0_i32, %c0_i32_0 : i32, i32, i32, i32
  }
  func.func @transform_3(%arg0: i32, %arg1: i32) -> (i32, i32, i32) {
    %c0_i32 = arith.constant 0 : i32
    %c0_i32_0 = arith.constant 0 : i32
    return %arg0, %c0_i32, %arg1 : i32, i32, i32
  }
}

</mosaic_0001>

<llo_original>
// kernel: tpu_custom_call.1
$region0: #{tpu_custom_call.1}
  #allocation0 [shape = 'u32[]', space=smem, size = 0x4, offset = 0x4, fixed_abs, tag = 'smem constant byte address 0x4 - core index']
  #allocation1 [shape = 'u32[144,128]{1,0:T(1,128)}', space=vmem, size = 0x12000, scoped, tag = 'internal scratch']
  #allocation2 [shape = 'f32[256,64]{1,0:T(8,128)}', space=vmem, size = 0x20000, scoped, tag = 'scratch operand']
  %s0 = inlined_call_operand.vmem [shape: f32[80,64], index: 0, kind: input, shape index: {}]
  %s1 = inlined_call_operand.vmem [shape: f32[32,40], index: 1, kind: input, shape index: {}]
  %s2 = inlined_call_operand.vmem [shape: f32[2,1,264,16], index: 2, kind: input, shape index: {}]
  %s3 = inlined_call_operand.hbm [shape: f32[2,32,256], index: 3, kind: output, shape index: {}]
  %s4 = sld [smem:[#allocation0]]
  $region45: #{tpu_custom_call.1} parent=0
    _
  %s6 = ssub.s32 1, %s4
  %s7 = scalar_select 0, %s6, %s4
  $region1: #{tpu_custom_call.1} parent=0
    #allocation3 [shape = 'u8[65536]{0}', space=vmem, size = 0x10000, scoped, tag = 'output window, operand 0']
    #allocation4 [shape = 's32[2]{0}', space=sflag, size = 0x8, scoped, tag = 'scoped memory for tpu_custom_call.1']
    %8 = vsyncpa [#allocation4], 0
    %s9 = scalar_lea.sflag [#allocation4], 1
    %10 = vsyncpa %s9, 0
    loop: start=0, step=1, limit=4
    $region2: #{tpu_custom_call.1} parent=1 // loop_pre_header
      _
    $region3: #{tpu_custom_call.1} parent=1 // loop_header
      %s12 = sphi 0, %s16
      %p13 = scmp.ge.s32.totalorder %s12, 4
      %s19 = sphi 0, %s31
      %s20 = sphi 0, %s27
      %s21 = sphi 0, %s19
      %s22 = sphi 0, %s20
      %s23 = sphi 0, %s21
      %s24 = sphi 0, %s22
      %s32 = sphi 0, %s32
      %s34 = sphi 0, %s32
      %s35 = sphi 0, %s34
      %s49 = sphi 0, %s35
      %s53 = sphi 0, %s53
      %s55 = sphi 0, %s53
      %s56 = sphi 0, %s55
      %s70 = sphi 0, %s56
      %s78 = sphi 0, %s80
      %s81 = sphi 0, %s78
      %s82 = sphi 0, %s81
      %s98 = sphi 0, %s82
      %s106 = sphi 0, %s108
      %s109 = sphi 0, %s106
      %s110 = sphi 0, %s109
      %s126 = sphi 0, %s110
    $region4: #{tpu_custom_call.1} parent=1 // loop_header_branch
      %15 = sbr.rel (%p13) target = $region8
    $region5: #{tpu_custom_call.1} parent=1 // loop_body
      %s17 = ssub.s32 %s12, 1
      %s18 = ssub.s32 %s12, 2
      %s25 = sadd.s32 1, %s20
      %p26 = scmp.ge.s32.totalorder %s25, 1
      %s27 = scalar_select %p26, 0, %s25
      %s28 = sadd.s32 1, %s19
      %s29 = scalar_select %p26, %s28, %s19
      %p30 = scmp.ge.s32.totalorder %s29, 2
      %s31 = scalar_select %p30, 0, %s29
      %s33 = sadd.s32 %s32, 1
      %p36 = scmp.eq.s32.totalorder %s12, 1
      %p37 = scmp.ne.s32.totalorder %s32, %s34
      %p38 = scmp.eq.s32.totalorder %s12, 0
      %p39 = por %p37, %p38
      %p40 = scmp.ne.s32.totalorder %s32, %s34
      %p41 = scmp.eq.s32.totalorder %s17, 1
      %p42 = por %p40, %p41
      %p43 = scmp.ne.s32.totalorder %s34, %s35
      %p44 = scmp.eq.s32.totalorder %s17, 0
      %p45 = por %p43, %p44
      %p46 = scmp.ne.s32.totalorder %s34, %s35
      %p47 = scmp.eq.s32.totalorder %s18, 1
      %p48 = por %p46, %p47
      %p50 = scmp.ne.s32.totalorder %s35, %s49
      %p51 = scmp.eq.s32.totalorder %s18, 0
      %p52 = por %p50, %p51
      %s54 = sadd.s32 %s53, 1
      %p57 = scmp.eq.s32.totalorder %s12, 1
      %p58 = scmp.ne.s32.totalorder %s53, %s55
      %p59 = scmp.eq.s32.totalorder %s12, 0
      %p60 = por %p58, %p59
      %p61 = scmp.ne.s32.totalorder %s53, %s55
      %p62 = scmp.eq.s32.totalorder %s17, 1
      %p63 = por %p61, %p62
      %p64 = scmp.ne.s32.totalorder %s55, %s56
      %p65 = scmp.eq.s32.totalorder %s17, 0
      %p66 = por %p64, %p65
      %p67 = scmp.ne.s32.totalorder %s55, %s56
      %p68 = scmp.eq.s32.totalorder %s18, 1
      %p69 = por %p67, %p68
      %p71 = scmp.ne.s32.totalorder %s56, %s70
      %p72 = scmp.eq.s32.totalorder %s18, 0
      %p73 = por %p71, %p72
      %s74 = ssub.s32 %s19, %s31
      %s75 = ssub.s32 %s20, %s27
      %s76 = sor.u32 %s74, %s75
      %p77 = scmp.eq.s32.totalorder %s76, 0
      %s79 = sadd.s32 %s78, 1
      %s80 = scalar_select %p77, %s78, %s79
      %p83 = pneg %p77
      %p84 = scmp.eq.s32.totalorder %s12, 1
      %p85 = por %p83, %p84
      %p86 = scmp.ne.s32.totalorder %s78, %s81
      %p87 = scmp.eq.s32.totalorder %s12, 0
      %p88 = por %p86, %p87
      %p89 = scmp.ne.s32.totalorder %s78, %s81
      %p90 = scmp.eq.s32.totalorder %s17, 1
      %p91 = por %p89, %p90
      %p92 = scmp.ne.s32.totalorder %s81, %s82
      %p93 = scmp.eq.s32.totalorder %s17, 0
      %p94 = por %p92, %p93
      %p95 = scmp.ne.s32.totalorder %s81, %s82
      %p96 = scmp.eq.s32.totalorder %s18, 1
      %p97 = por %p95, %p96
      %p99 = scmp.ne.s32.totalorder %s82, %s98
      %p100 = scmp.eq.s32.totalorder %s18, 0
      %p101 = por %p99, %p100
      %s102 = ssub.s32 %s19, %s31
      %s103 = ssub.s32 %s20, %s27
      %s104 = sor.u32 %s102, %s103
      %p105 = scmp.eq.s32.totalorder %s104, 0
      %s107 = sadd.s32 %s106, 1
      %s108 = scalar_select %p105, %s106, %s107
      %p111 = pneg %p105
      %p112 = scmp.eq.s32.totalorder %s12, 1
      %p113 = por %p111, %p112
      %p114 = scmp.ne.s32.totalorder %s106, %s109
      %p115 = scmp.eq.s32.totalorder %s12, 0
      %p116 = por %p114, %p115
      %p117 = scmp.ne.s32.totalorder %s106, %s109
      %p118 = scmp.eq.s32.totalorder %s17, 1
      %p119 = por %p117, %p118
      %p120 = scmp.ne.s32.totalorder %s109, %s110
      %p121 = scmp.eq.s32.totalorder %s17, 0
      %p122 = por %p120, %p121
      %p123 = scmp.ne.s32.totalorder %s109, %s110
      %p124 = scmp.eq.s32.totalorder %s18, 1
      %p125 = por %p123, %p124
      %p127 = scmp.ne.s32.totalorder %s110, %s126
      %p128 = scmp.eq.s32.totalorder %s18, 0
      %p129 = por %p127, %p128
      %p130 = scmp.le.s32.totalorder 1, %s12
      %p131 = scmp.lt.s32.totalorder %s12, 3
      %p132 = pnand %p130, %p131
      %p133 = pneg %p132
      // Predicated region
      $region9: #{tpu_custom_call.1} parent=5 // pred_check
        _
      $region10: #{tpu_custom_call.1} parent=5 // pred_check_branch
        %135 = sbr.rel (%p132) target = $region12
      $region11: #{tpu_custom_call.1} parent=5 // pred_region
        %s136 = ssub.s32 %s12, 1
        // Predicated region
        $region13: #{tpu_custom_call.1} parent=11 // pred_check
          %p137 = pneg %p45
        $region14: #{tpu_custom_call.1} parent=11 // pred_check_branch
          %139 = sbr.rel (%p137) target = $region16
        $region15: #{tpu_custom_call.1} parent=11 // pred_region
          _
        $region16: #{tpu_custom_call.1} parent=11 // pred_fallthru
          _
        // Predicated region
        $region17: #{tpu_custom_call.1} parent=11 // pred_check
          %p140 = pneg %p66
        $region18: #{tpu_custom_call.1} parent=11 // pred_check_branch
          %142 = sbr.rel (%p140) target = $region20
        $region19: #{tpu_custom_call.1} parent=11 // pred_region
          _
        $region20: #{tpu_custom_call.1} parent=11 // pred_fallthru
          _
      $region12: #{tpu_custom_call.1} parent=5 // pred_fallthru
        _
      %p143 = scmp.lt.s32.totalorder %s12, 2
      // Predicated region
      $region21: #{tpu_custom_call.1} parent=5 // pred_check
        %p144 = pneg %p143
      $region22: #{tpu_custom_call.1} parent=5 // pred_check_branch
        %146 = sbr.rel (%p144) target = $region24
      $region23: #{tpu_custom_call.1} parent=5 // pred_region
        // Predicated region
        $region25: #{tpu_custom_call.1} parent=23 // pred_check
          %p147 = pneg %p88
        $region26: #{tpu_custom_call.1} parent=23 // pred_check_branch
          %149 = sbr.rel (%p147) target = $region28
        $region27: #{tpu_custom_call.1} parent=23 // pred_region
          %p150 = scmp.lt.s32.totalorder %s19, 1
          %s151 = scalar_select %p150, %s19, 1
          %p152 = scmp.lt.s32.totalorder %s20, 0
          %s153 = scalar_select %p152, %s20, 0
          %s154 = smul.addr %s153, 33
          %s155 = smul.addr %s151, 33
          %s156 = sadd.s32 %s154, %s155
          %s157 = smul.addr %s156, 8
          %s158 = scalar_lea.vmem %s2, %s157
        $region28: #{tpu_custom_call.1} parent=23 // pred_fallthru
          _
      $region24: #{tpu_custom_call.1} parent=5 // pred_fallthru
        _
      %p159 = scmp.le.s32.totalorder 1, %s12
      %p160 = scmp.lt.s32.totalorder %s12, 3
      %p161 = pnand %p159, %p160
      %p162 = pneg %p161
      // Predicated region
      $region29: #{tpu_custom_call.1} parent=5 // pred_check
        _
      $region30: #{tpu_custom_call.1} parent=5 // pred_check_branch
        %164 = sbr.rel (%p161) target = $region32
      $region31: #{tpu_custom_call.1} parent=5 // pred_region
        %s165 = ssub.s32 %s12, 1
        %p166 = pneg %p45
        %p167 = pneg %p42
        %p168 = pneg %p66
        %p169 = pneg %p63
        %p170 = scmp.lt.s32.totalorder %s21, 1
        %s171 = scalar_select %p170, %s21, 1
        %p172 = scmp.lt.s32.totalorder %s22, 0
        %s173 = scalar_select %p172, %s22, 0
        %s174 = smul.addr %s173, 33
        %s175 = smul.addr %s171, 33
        %s176 = sadd.s32 %s174, %s175
        %s177 = smul.addr %s176, 8
        %s178 = scalar_lea.vmem %s2, %s177
        %p179 = pneg %p94
        %p180 = pneg %p91
        %p181 = pneg %p122
        %p182 = pneg %p119
        %s183 = sand.u32 %s109, 1
        %s184 = scalar_lea.sflag [#allocation4], %s183
        %s185 = sand.u32 %s109, 1
        %s186 = smul.addr %s185, 64
        %s187 = scalar_lea.vmem [#allocation3], %s186
        %p188 = scmp.lt.s32.totalorder %s21, 1
        %s189 = scalar_select %p188, %s21, 1
        %p190 = scmp.lt.s32.totalorder %s22, 0
        %s191 = scalar_select %p190, %s22, 0
        %s192 = smul.addr %s191, 33
        %s193 = smul.addr %s189, 33
        %s194 = sadd.s32 %s192, %s193
        %s195 = smul.addr %s194, 8
        %s196 = scalar_lea.vmem %s2, %s195
        %s197 = smul.u32 2, %s22
        %v198 = vld [vmem:[%s196] sm:$0xff]
        %v199 = vld [vmem:[%s196 + $0x8] sm:$0xff]
        %v200 = vld [vmem:[%s196 + $0x10] sm:$0xff]
        %v201 = vld [vmem:[%s196 + $0x18] sm:$0xff]
        %v202 = vld [vmem:[%s196 + $0x20] sm:$0xff]
        %v203 = vld [vmem:[%s196 + $0x28] sm:$0xff]
        %v204 = vld [vmem:[%s196 + $0x30] sm:$0xff]
        %v205 = vld [vmem:[%s196 + $0x38] sm:$0xff]
        %v206 = vld [vmem:[%s196 + $0x40] sm:$0xff]
        %v207 = vld [vmem:[%s196 + $0x48] sm:$0xff]
        %v208 = vld [vmem:[%s196 + $0x50] sm:$0xff]
        %v209 = vld [vmem:[%s196 + $0x58] sm:$0xff]
        %v210 = vld [vmem:[%s196 + $0x60] sm:$0xff]
        %v211 = vld [vmem:[%s196 + $0x68] sm:$0xff]
        %v212 = vld [vmem:[%s196 + $0x70] sm:$0xff]
        %v213 = vld [vmem:[%s196 + $0x78] sm:$0xff]
        %v214 = vld [vmem:[%s196 + $0x80] sm:$0xff]
        %v215 = vld [vmem:[%s196 + $0x88] sm:$0xff]
        %v216 = vld [vmem:[%s196 + $0x90] sm:$0xff]
        %v217 = vld [vmem:[%s196 + $0x98] sm:$0xff]
        %v218 = vld [vmem:[%s196 + $0xa0] sm:$0xff]
        %v219 = vld [vmem:[%s196 + $0xa8] sm:$0xff]
        %v220 = vld [vmem:[%s196 + $0xb0] sm:$0xff]
        %v221 = vld [vmem:[%s196 + $0xb8] sm:$0xff]
        %v222 = vld [vmem:[%s196 + $0xc0] sm:$0xff]
        %v223 = vld [vmem:[%s196 + $0xc8] sm:$0xff]
        %v224 = vld [vmem:[%s196 + $0xd0] sm:$0xff]
        %v225 = vld [vmem:[%s196 + $0xd8] sm:$0xff]
        %v226 = vld [vmem:[%s196 + $0xe0] sm:$0xff]
        %v227 = vld [vmem:[%s196 + $0xe8] sm:$0xff]
        %v228 = vld [vmem:[%s196 + $0xf0] sm:$0xff]
        %v229 = vld [vmem:[%s196 + $0xf8] sm:$0xff]
        %vm230 = vcmask 130048
        %231 = vst.msk [vmem:[#allocation2] sm:$0xff] %vm230, %v198
        %232 = vst.msk [vmem:[#allocation2 + $0x8] sm:$0xff] %vm230, %v199
        %233 = vst.msk [vmem:[#allocation2 + $0x10] sm:$0xff] %vm230, %v200
        %234 = vst.msk [vmem:[#allocation2 + $0x18] sm:$0xff] %vm230, %v201
        %235 = vst.msk [vmem:[#allocation2 + $0x20] sm:$0xff] %vm230, %v202
        %236 = vst.msk [vmem:[#allocation2 + $0x28] sm:$0xff] %vm230, %v203
        %237 = vst.msk [vmem:[#allocation2 + $0x30] sm:$0xff] %vm230, %v204
        %238 = vst.msk [vmem:[#allocation2 + $0x38] sm:$0xff] %vm230, %v205
        %239 = vst.msk [vmem:[#allocation2 + $0x40] sm:$0xff] %vm230, %v206
        %240 = vst.msk [vmem:[#allocation2 + $0x48] sm:$0xff] %vm230, %v207
        %241 = vst.msk [vmem:[#allocation2 + $0x50] sm:$0xff] %vm230, %v208
        %242 = vst.msk [vmem:[#allocation2 + $0x58] sm:$0xff] %vm230, %v209
        %243 = vst.msk [vmem:[#allocation2 + $0x60] sm:$0xff] %vm230, %v210
        %244 = vst.msk [vmem:[#allocation2 + $0x68] sm:$0xff] %vm230, %v211
        %245 = vst.msk [vmem:[#allocation2 + $0x70] sm:$0xff] %vm230, %v212
        %246 = vst.msk [vmem:[#allocation2 + $0x78] sm:$0xff] %vm230, %v213
        %247 = vst.msk [vmem:[#allocation2 + $0x80] sm:$0xff] %vm230, %v214
        %248 = vst.msk [vmem:[#allocation2 + $0x88] sm:$0xff] %vm230, %v215
        %249 = vst.msk [vmem:[#allocation2 + $0x90] sm:$0xff] %vm230, %v216
        %250 = vst.msk [vmem:[#allocation2 + $0x98] sm:$0xff] %vm230, %v217
        %251 = vst.msk [vmem:[#allocation2 + $0xa0] sm:$0xff] %vm230, %v218
        %252 = vst.msk [vmem:[#allocation2 + $0xa8] sm:$0xff] %vm230, %v219
        %253 = vst.msk [vmem:[#allocation2 + $0xb0] sm:$0xff] %vm230, %v220
        %254 = vst.msk [vmem:[#allocation2 + $0xb8] sm:$0xff] %vm230, %v221
        %255 = vst.msk [vmem:[#allocation2 + $0xc0] sm:$0xff] %vm230, %v222
        %256 = vst.msk [vmem:[#allocation2 + $0xc8] sm:$0xff] %vm230, %v223
        %257 = vst.msk [vmem:[#allocation2 + $0xd0] sm:$0xff] %vm230, %v224
        %258 = vst.msk [vmem:[#allocation2 + $0xd8] sm:$0xff] %vm230, %v225
        %259 = vst.msk [vmem:[#allocation2 + $0xe0] sm:$0xff] %vm230, %v226
        %260 = vst.msk [vmem:[#allocation2 + $0xe8] sm:$0xff] %vm230, %v227
        %261 = vst.msk [vmem:[#allocation2 + $0xf0] sm:$0xff] %vm230, %v228
        %262 = vst.msk [vmem:[#allocation2 + $0xf8] sm:$0xff] %vm230, %v229
        %v263 = vld [vmem:[%s196 + $0x1] sm:$0xff]
        %v264 = vld [vmem:[%s196 + $0x9] sm:$0xff]
        %v265 = vld [vmem:[%s196 + $0x11] sm:$0xff]
        %v266 = vld [vmem:[%s196 + $0x19] sm:$0xff]
        %v267 = vld [vmem:[%s196 + $0x21] sm:$0xff]
        %v268 = vld [vmem:[%s196 + $0x29] sm:$0xff]
        %v269 = vld [vmem:[%s196 + $0x31] sm:$0xff]
        %v270 = vld [vmem:[%s196 + $0x39] sm:$0xff]
        %v271 = vld [vmem:[%s196 + $0x41] sm:$0xff]
        %v272 = vld [vmem:[%s196 + $0x49] sm:$0xff]
        %v273 = vld [vmem:[%s196 + $0x51] sm:$0xff]
        %v274 = vld [vmem:[%s196 + $0x59] sm:$0xff]
        %v275 = vld [vmem:[%s196 + $0x61] sm:$0xff]
        %v276 = vld [vmem:[%s196 + $0x69] sm:$0xff]
        %v277 = vld [vmem:[%s196 + $0x71] sm:$0xff]
        %v278 = vld [vmem:[%s196 + $0x79] sm:$0xff]
        %v279 = vld [vmem:[%s196 + $0x81] sm:$0xff]
        %v280 = vld [vmem:[%s196 + $0x89] sm:$0xff]
        %v281 = vld [vmem:[%s196 + $0x91] sm:$0xff]
        %v282 = vld [vmem:[%s196 + $0x99] sm:$0xff]
        %v283 = vld [vmem:[%s196 + $0xa1] sm:$0xff]
        %v284 = vld [vmem:[%s196 + $0xa9] sm:$0xff]
        %v285 = vld [vmem:[%s196 + $0xb1] sm:$0xff]
        %v286 = vld [vmem:[%s196 + $0xb9] sm:$0xff]
        %v287 = vld [vmem:[%s196 + $0xc1] sm:$0xff]
        %v288 = vld [vmem:[%s196 + $0xc9] sm:$0xff]
        %v289 = vld [vmem:[%s196 + $0xd1] sm:$0xff]
        %v290 = vld [vmem:[%s196 + $0xd9] sm:$0xff]
        %v291 = vld [vmem:[%s196 + $0xe1] sm:$0xff]
        %v292 = vld [vmem:[%s196 + $0xe9] sm:$0xff]
        %v293 = vld [vmem:[%s196 + $0xf1] sm:$0xff]
        %v294 = vld [vmem:[%s196 + $0xf9] sm:$0xff]
        %327 = vrot.lane.b32.xlu0 %v263, 16
        %v328 = vpop.permute.xlu0 %327
        %329 = vrot.lane.b32.xlu0 %v264, 16
        %v330 = vpop.permute.xlu0 %329
        %331 = vrot.lane.b32.xlu0 %v265, 16
        %v332 = vpop.permute.xlu0 %331
        %333 = vrot.lane.b32.xlu0 %v266, 16
        %v334 = vpop.permute.xlu0 %333
        %335 = vrot.lane.b32.xlu0 %v267, 16
        %v336 = vpop.permute.xlu0 %335
        %337 = vrot.lane.b32.xlu0 %v268, 16
        %v338 = vpop.permute.xlu0 %337
        %339 = vrot.lane.b32.xlu0 %v269, 16
        %v340 = vpop.permute.xlu0 %339
        %341 = vrot.lane.b32.xlu0 %v270, 16
        %v342 = vpop.permute.xlu0 %341
        %343 = vrot.lane.b32.xlu0 %v271, 16
        %v344 = vpop.permute.xlu0 %343
        %345 = vrot.lane.b32.xlu0 %v272, 16
        %v346 = vpop.permute.xlu0 %345
        %347 = vrot.lane.b32.xlu0 %v273, 16
        %v348 = vpop.permute.xlu0 %347
        %349 = vrot.lane.b32.xlu0 %v274, 16
        %v350 = vpop.permute.xlu0 %349
        %351 = vrot.lane.b32.xlu0 %v275, 16
        %v352 = vpop.permute.xlu0 %351
        %353 = vrot.lane.b32.xlu0 %v276, 16
        %v354 = vpop.permute.xlu0 %353
        %355 = vrot.lane.b32.xlu0 %v277, 16
        %v356 = vpop.permute.xlu0 %355
        %357 = vrot.lane.b32.xlu0 %v278, 16
        %v358 = vpop.permute.xlu0 %357
        %359 = vrot.lane.b32.xlu0 %v279, 16
        %v360 = vpop.permute.xlu0 %359
        %361 = vrot.lane.b32.xlu0 %v280, 16
        %v362 = vpop.permute.xlu0 %361
        %363 = vrot.lane.b32.xlu0 %v281, 16
        %v364 = vpop.permute.xlu0 %363
        %365 = vrot.lane.b32.xlu0 %v282, 16
        %v366 = vpop.permute.xlu0 %365
        %367 = vrot.lane.b32.xlu0 %v283, 16
        %v368 = vpop.permute.xlu0 %367
        %369 = vrot.lane.b32.xlu0 %v284, 16
        %v370 = vpop.permute.xlu0 %369
        %371 = vrot.lane.b32.xlu0 %v285, 16
        %v372 = vpop.permute.xlu0 %371
        %373 = vrot.lane.b32.xlu0 %v286, 16
        %v374 = vpop.permute.xlu0 %373
        %375 = vrot.lane.b32.xlu0 %v287, 16
        %v376 = vpop.permute.xlu0 %375
        %377 = vrot.lane.b32.xlu0 %v288, 16
        %v378 = vpop.permute.xlu0 %377
        %379 = vrot.lane.b32.xlu0 %v289, 16
        %v380 = vpop.permute.xlu0 %379
        %381 = vrot.lane.b32.xlu0 %v290, 16
        %v382 = vpop.permute.xlu0 %381
        %383 = vrot.lane.b32.xlu0 %v291, 16
        %v384 = vpop.permute.xlu0 %383
        %385 = vrot.lane.b32.xlu0 %v292, 16
        %v386 = vpop.permute.xlu0 %385
        %387 = vrot.lane.b32.xlu0 %v293, 16
        %v388 = vpop.permute.xlu0 %387
        %389 = vrot.lane.b32.xlu0 %v294, 16
        %v390 = vpop.permute.xlu0 %389
        %vm423 = vcmask 261248
        %424 = vst.msk [vmem:[#allocation2] sm:$0xff] %vm423, %v328
        %425 = vst.msk [vmem:[#allocation2 + $0x8] sm:$0xff] %vm423, %v330
        %426 = vst.msk [vmem:[#allocation2 + $0x10] sm:$0xff] %vm423, %v332
        %427 = vst.msk [vmem:[#allocation2 + $0x18] sm:$0xff] %vm423, %v334
        %428 = vst.msk [vmem:[#allocation2 + $0x20] sm:$0xff] %vm423, %v336
        %429 = vst.msk [vmem:[#allocation2 + $0x28] sm:$0xff] %vm423, %v338
        %430 = vst.msk [vmem:[#allocation2 + $0x30] sm:$0xff] %vm423, %v340
        %431 = vst.msk [vmem:[#allocation2 + $0x38] sm:$0xff] %vm423, %v342
        %432 = vst.msk [vmem:[#allocation2 + $0x40] sm:$0xff] %vm423, %v344
        %433 = vst.msk [vmem:[#allocation2 + $0x48] sm:$0xff] %vm423, %v346
        %434 = vst.msk [vmem:[#allocation2 + $0x50] sm:$0xff] %vm423, %v348
        %435 = vst.msk [vmem:[#allocation2 + $0x58] sm:$0xff] %vm423, %v350
        %436 = vst.msk [vmem:[#allocation2 + $0x60] sm:$0xff] %vm423, %v352
        %437 = vst.msk [vmem:[#allocation2 + $0x68] sm:$0xff] %vm423, %v354
        %438 = vst.msk [vmem:[#allocation2 + $0x70] sm:$0xff] %vm423, %v356
        %439 = vst.msk [vmem:[#allocation2 + $0x78] sm:$0xff] %vm423, %v358
        %440 = vst.msk [vmem:[#allocation2 + $0x80] sm:$0xff] %vm423, %v360
        %441 = vst.msk [vmem:[#allocation2 + $0x88] sm:$0xff] %vm423, %v362
        %442 = vst.msk [vmem:[#allocation2 + $0x90] sm:$0xff] %vm423, %v364
        %443 = vst.msk [vmem:[#allocation2 + $0x98] sm:$0xff] %vm423, %v366
        %444 = vst.msk [vmem:[#allocation2 + $0xa0] sm:$0xff] %vm423, %v368
        %445 = vst.msk [vmem:[#allocation2 + $0xa8] sm:$0xff] %vm423, %v370
        %446 = vst.msk [vmem:[#allocation2 + $0xb0] sm:$0xff] %vm423, %v372
        %447 = vst.msk [vmem:[#allocation2 + $0xb8] sm:$0xff] %vm423, %v374
        %448 = vst.msk [vmem:[#allocation2 + $0xc0] sm:$0xff] %vm423, %v376
        %449 = vst.msk [vmem:[#allocation2 + $0xc8] sm:$0xff] %vm423, %v378
        %450 = vst.msk [vmem:[#allocation2 + $0xd0] sm:$0xff] %vm423, %v380
        %451 = vst.msk [vmem:[#allocation2 + $0xd8] sm:$0xff] %vm423, %v382
        %452 = vst.msk [vmem:[#allocation2 + $0xe0] sm:$0xff] %vm423, %v384
        %453 = vst.msk [vmem:[#allocation2 + $0xe8] sm:$0xff] %vm423, %v386
        %454 = vst.msk [vmem:[#allocation2 + $0xf0] sm:$0xff] %vm423, %v388
        %455 = vst.msk [vmem:[#allocation2 + $0xf8] sm:$0xff] %vm423, %v390
        %v456 = vld [vmem:[%s196 + $0x2] sm:$0xff]
        %v457 = vld [vmem:[%s196 + $0xa] sm:$0xff]
        %v458 = vld [vmem:[%s196 + $0x12] sm:$0xff]
        %v459 = vld [vmem:[%s196 + $0x1a] sm:$0xff]
        %v460 = vld [vmem:[%s196 + $0x22] sm:$0xff]
        %v461 = vld [vmem:[%s196 + $0x2a] sm:$0xff]
        %v462 = vld [vmem:[%s196 + $0x32] sm:$0xff]
        %v463 = vld [vmem:[%s196 + $0x3a] sm:$0xff]
        %v464 = vld [vmem:[%s196 + $0x42] sm:$0xff]
        %v465 = vld [vmem:[%s196 + $0x4a] sm:$0xff]
        %v466 = vld [vmem:[%s196 + $0x52] sm:$0xff]
        %v467 = vld [vmem:[%s196 + $0x5a] sm:$0xff]
        %v468 = vld [vmem:[%s196 + $0x62] sm:$0xff]
        %v469 = vld [vmem:[%s196 + $0x6a] sm:$0xff]
        %v470 = vld [vmem:[%s196 + $0x72] sm:$0xff]
        %v471 = vld [vmem:[%s196 + $0x7a] sm:$0xff]
        %v472 = vld [vmem:[%s196 + $0x82] sm:$0xff]
        %v473 = vld [vmem:[%s196 + $0x8a] sm:$0xff]
        %v474 = vld [vmem:[%s196 + $0x92] sm:$0xff]
        %v475 = vld [vmem:[%s196 + $0x9a] sm:$0xff]
        %v476 = vld [vmem:[%s196 + $0xa2] sm:$0xff]
        %v477 = vld [vmem:[%s196 + $0xaa] sm:$0xff]
        %v478 = vld [vmem:[%s196 + $0xb2] sm:$0xff]
        %v479 = vld [vmem:[%s196 + $0xba] sm:$0xff]
        %v480 = vld [vmem:[%s196 + $0xc2] sm:$0xff]
        %v481 = vld [vmem:[%s196 + $0xca] sm:$0xff]
        %v482 = vld [vmem:[%s196 + $0xd2] sm:$0xff]
        %v483 = vld [vmem:[%s196 + $0xda] sm:$0xff]
        %v484 = vld [vmem:[%s196 + $0xe2] sm:$0xff]
        %v485 = vld [vmem:[%s196 + $0xea] sm:$0xff]
        %v486 = vld [vmem:[%s196 + $0xf2] sm:$0xff]
        %v487 = vld [vmem:[%s196 + $0xfa] sm:$0xff]
        %520 = vrot.lane.b32.xlu0 %v456, 32
        %v521 = vpop.permute.xlu0 %520
        %522 = vrot.lane.b32.xlu0 %v457, 32
        %v523 = vpop.permute.xlu0 %522
        %524 = vrot.lane.b32.xlu0 %v458, 32
        %v525 = vpop.permute.xlu0 %524
        %526 = vrot.lane.b32.xlu0 %v459, 32
        %v527 = vpop.permute.xlu0 %526
        %528 = vrot.lane.b32.xlu0 %v460, 32
        %v529 = vpop.permute.xlu0 %528
        %530 = vrot.lane.b32.xlu0 %v461, 32
        %v531 = vpop.permute.xlu0 %530
        %532 = vrot.lane.b32.xlu0 %v462, 32
        %v533 = vpop.permute.xlu0 %532
        %534 = vrot.lane.b32.xlu0 %v463, 32
        %v535 = vpop.permute.xlu0 %534
        %536 = vrot.lane.b32.xlu0 %v464, 32
        %v537 = vpop.permute.xlu0 %536
        %538 = vrot.lane.b32.xlu0 %v465, 32
        %v539 = vpop.permute.xlu0 %538
        %540 = vrot.lane.b32.xlu0 %v466, 32
        %v541 = vpop.permute.xlu0 %540
        %542 = vrot.lane.b32.xlu0 %v467, 32
        %v543 = vpop.permute.xlu0 %542
        %544 = vrot.lane.b32.xlu0 %v468, 32
        %v545 = vpop.permute.xlu0 %544
        %546 = vrot.lane.b32.xlu0 %v469, 32
        %v547 = vpop.permute.xlu0 %546
        %548 = vrot.lane.b32.xlu0 %v470, 32
        %v549 = vpop.permute.xlu0 %548
        %550 = vrot.lane.b32.xlu0 %v471, 32
        %v551 = vpop.permute.xlu0 %550
        %552 = vrot.lane.b32.xlu0 %v472, 32
        %v553 = vpop.permute.xlu0 %552
        %554 = vrot.lane.b32.xlu0 %v473, 32
        %v555 = vpop.permute.xlu0 %554
        %556 = vrot.lane.b32.xlu0 %v474, 32
        %v557 = vpop.permute.xlu0 %556
        %558 = vrot.lane.b32.xlu0 %v475, 32
        %v559 = vpop.permute.xlu0 %558
        %560 = vrot.lane.b32.xlu0 %v476, 32
        %v561 = vpop.permute.xlu0 %560
        %562 = vrot.lane.b32.xlu0 %v477, 32
        %v563 = vpop.permute.xlu0 %562
        %564 = vrot.lane.b32.xlu0 %v478, 32
        %v565 = vpop.permute.xlu0 %564
        %566 = vrot.lane.b32.xlu0 %v479, 32
        %v567 = vpop.permute.xlu0 %566
        %568 = vrot.lane.b32.xlu0 %v480, 32
        %v569 = vpop.permute.xlu0 %568
        %570 = vrot.lane.b32.xlu0 %v481, 32
        %v571 = vpop.permute.xlu0 %570
        %572 = vrot.lane.b32.xlu0 %v482, 32
        %v573 = vpop.permute.xlu0 %572
        %574 = vrot.lane.b32.xlu0 %v483, 32
        %v575 = vpop.permute.xlu0 %574
        %576 = vrot.lane.b32.xlu0 %v484, 32
        %v577 = vpop.permute.xlu0 %576
        %578 = vrot.lane.b32.xlu0 %v485, 32
        %v579 = vpop.permute.xlu0 %578
        %580 = vrot.lane.b32.xlu0 %v486, 32
        %v581 = vpop.permute.xlu0 %580
        %582 = vrot.lane.b32.xlu0 %v487, 32
        %v583 = vpop.permute.xlu0 %582
        %vm616 = vcmask 392448
        %617 = vst.msk [vmem:[#allocation2] sm:$0xff] %vm616, %v521
        %618 = vst.msk [vmem:[#allocation2 + $0x8] sm:$0xff] %vm616, %v523
        %619 = vst.msk [vmem:[#allocation2 + $0x10] sm:$0xff] %vm616, %v525
        %620 = vst.msk [vmem:[#allocation2 + $0x18] sm:$0xff] %vm616, %v527
        %621 = vst.msk [vmem:[#allocation2 + $0x20] sm:$0xff] %vm616, %v529
        %622 = vst.msk [vmem:[#allocation2 + $0x28] sm:$0xff] %vm616, %v531
        %623 = vst.msk [vmem:[#allocation2 + $0x30] sm:$0xff] %vm616, %v533
        %624 = vst.msk [vmem:[#allocation2 + $0x38] sm:$0xff] %vm616, %v535
        %625 = vst.msk [vmem:[#allocation2 + $0x40] sm:$0xff] %vm616, %v537
        %626 = vst.msk [vmem:[#allocation2 + $0x48] sm:$0xff] %vm616, %v539
        %627 = vst.msk [vmem:[#allocation2 + $0x50] sm:$0xff] %vm616, %v541
        %628 = vst.msk [vmem:[#allocation2 + $0x58] sm:$0xff] %vm616, %v543
        %629 = vst.msk [vmem:[#allocation2 + $0x60] sm:$0xff] %vm616, %v545
        %630 = vst.msk [vmem:[#allocation2 + $0x68] sm:$0xff] %vm616, %v547
        %631 = vst.msk [vmem:[#allocation2 + $0x70] sm:$0xff] %vm616, %v549
        %632 = vst.msk [vmem:[#allocation2 + $0x78] sm:$0xff] %vm616, %v551
        %633 = vst.msk [vmem:[#allocation2 + $0x80] sm:$0xff] %vm616, %v553
        %634 = vst.msk [vmem:[#allocation2 + $0x88] sm:$0xff] %vm616, %v555
        %635 = vst.msk [vmem:[#allocation2 + $0x90] sm:$0xff] %vm616, %v557
        %636 = vst.msk [vmem:[#allocation2 + $0x98] sm:$0xff] %vm616, %v559
        %637 = vst.msk [vmem:[#allocation2 + $0xa0] sm:$0xff] %vm616, %v561
        %638 = vst.msk [vmem:[#allocation2 + $0xa8] sm:$0xff] %vm616, %v563
        %639 = vst.msk [vmem:[#allocation2 + $0xb0] sm:$0xff] %vm616, %v565
        %640 = vst.msk [vmem:[#allocation2 + $0xb8] sm:$0xff] %vm616, %v567
        %641 = vst.msk [vmem:[#allocation2 + $0xc0] sm:$0xff] %vm616, %v569
        %642 = vst.msk [vmem:[#allocation2 + $0xc8] sm:$0xff] %vm616, %v571
        %643 = vst.msk [vmem:[#allocation2 + $0xd0] sm:$0xff] %vm616, %v573
        %644 = vst.msk [vmem:[#allocation2 + $0xd8] sm:$0xff] %vm616, %v575
        %645 = vst.msk [vmem:[#allocation2 + $0xe0] sm:$0xff] %vm616, %v577
        %646 = vst.msk [vmem:[#allocation2 + $0xe8] sm:$0xff] %vm616, %v579
        %647 = vst.msk [vmem:[#allocation2 + $0xf0] sm:$0xff] %vm616, %v581
        %648 = vst.msk [vmem:[#allocation2 + $0xf8] sm:$0xff] %vm616, %v583
        %v649 = vld [vmem:[%s196 + $0x3] sm:$0xff]
        %v650 = vld [vmem:[%s196 + $0xb] sm:$0xff]
        %v651 = vld [vmem:[%s196 + $0x13] sm:$0xff]
        %v652 = vld [vmem:[%s196 + $0x1b] sm:$0xff]
        %v653 = vld [vmem:[%s196 + $0x23] sm:$0xff]
        %v654 = vld [vmem:[%s196 + $0x2b] sm:$0xff]
        %v655 = vld [vmem:[%s196 + $0x33] sm:$0xff]
        %v656 = vld [vmem:[%s196 + $0x3b] sm:$0xff]
        %v657 = vld [vmem:[%s196 + $0x43] sm:$0xff]
        %v658 = vld [vmem:[%s196 + $0x4b] sm:$0xff]
        %v659 = vld [vmem:[%s196 + $0x53] sm:$0xff]
        %v660 = vld [vmem:[%s196 + $0x5b] sm:$0xff]
        %v661 = vld [vmem:[%s196 + $0x63] sm:$0xff]
        %v662 = vld [vmem:[%s196 + $0x6b] sm:$0xff]
        %v663 = vld [vmem:[%s196 + $0x73] sm:$0xff]
        %v664 = vld [vmem:[%s196 + $0x7b] sm:$0xff]
        %v665 = vld [vmem:[%s196 + $0x83] sm:$0xff]
        %v666 = vld [vmem:[%s196 + $0x8b] sm:$0xff]
        %v667 = vld [vmem:[%s196 + $0x93] sm:$0xff]
        %v668 = vld [vmem:[%s196 + $0x9b] sm:$0xff]
        %v669 = vld [vmem:[%s196 + $0xa3] sm:$0xff]
        %v670 = vld [vmem:[%s196 + $0xab] sm:$0xff]
        %v671 = vld [vmem:[%s196 + $0xb3] sm:$0xff]
        %v672 = vld [vmem:[%s196 + $0xbb] sm:$0xff]
        %v673 = vld [vmem:[%s196 + $0xc3] sm:$0xff]
        %v674 = vld [vmem:[%s196 + $0xcb] sm:$0xff]
        %v675 = vld [vmem:[%s196 + $0xd3] sm:$0xff]
        %v676 = vld [vmem:[%s196 + $0xdb] sm:$0xff]
        %v677 = vld [vmem:[%s196 + $0xe3] sm:$0xff]
        %v678 = vld [vmem:[%s196 + $0xeb] sm:$0xff]
        %v679 = vld [vmem:[%s196 + $0xf3] sm:$0xff]
        %v680 = vld [vmem:[%s196 + $0xfb] sm:$0xff]
        %713 = vrot.lane.b32.xlu0 %v649, 48
        %v714 = vpop.permute.xlu0 %713
        %715 = vrot.lane.b32.xlu0 %v650, 48
        %v716 = vpop.permute.xlu0 %715
        %717 = vrot.lane.b32.xlu0 %v651, 48
        %v718 = vpop.permute.xlu0 %717
        %719 = vrot.lane.b32.xlu0 %v652, 48
        %v720 = vpop.permute.xlu0 %719
        %721 = vrot.lane.b32.xlu0 %v653, 48
        %v722 = vpop.permute.xlu0 %721
        %723 = vrot.lane.b32.xlu0 %v654, 48
        %v724 = vpop.permute.xlu0 %723
        %725 = vrot.lane.b32.xlu0 %v655, 48
        %v726 = vpop.permute.xlu0 %725
        %727 = vrot.lane.b32.xlu0 %v656, 48
        %v728 = vpop.permute.xlu0 %727
        %729 = vrot.lane.b32.xlu0 %v657, 48
        %v730 = vpop.permute.xlu0 %729
        %731 = vrot.lane.b32.xlu0 %v658, 48
        %v732 = vpop.permute.xlu0 %731
        %733 = vrot.lane.b32.xlu0 %v659, 48
        %v734 = vpop.permute.xlu0 %733
        %735 = vrot.lane.b32.xlu0 %v660, 48
        %v736 = vpop.permute.xlu0 %735
        %737 = vrot.lane.b32.xlu0 %v661, 48
        %v738 = vpop.permute.xlu0 %737
        %739 = vrot.lane.b32.xlu0 %v662, 48
        %v740 = vpop.permute.xlu0 %739
        %741 = vrot.lane.b32.xlu0 %v663, 48
        %v742 = vpop.permute.xlu0 %741
        %743 = vrot.lane.b32.xlu0 %v664, 48
        %v744 = vpop.permute.xlu0 %743
        %745 = vrot.lane.b32.xlu0 %v665, 48
        %v746 = vpop.permute.xlu0 %745
        %747 = vrot.lane.b32.xlu0 %v666, 48
        %v748 = vpop.permute.xlu0 %747
        %749 = vrot.lane.b32.xlu0 %v667, 48
        %v750 = vpop.permute.xlu0 %749
        %751 = vrot.lane.b32.xlu0 %v668, 48
        %v752 = vpop.permute.xlu0 %751
        %753 = vrot.lane.b32.xlu0 %v669, 48
        %v754 = vpop.permute.xlu0 %753
        %755 = vrot.lane.b32.xlu0 %v670, 48
        %v756 = vpop.permute.xlu0 %755
        %757 = vrot.lane.b32.xlu0 %v671, 48
        %v758 = vpop.permute.xlu0 %757
        %759 = vrot.lane.b32.xlu0 %v672, 48
        %v760 = vpop.permute.xlu0 %759
        %761 = vrot.lane.b32.xlu0 %v673, 48
        %v762 = vpop.permute.xlu0 %761
        %763 = vrot.lane.b32.xlu0 %v674, 48
        %v764 = vpop.permute.xlu0 %763
        %765 = vrot.lane.b32.xlu0 %v675, 48
        %v766 = vpop.permute.xlu0 %765
        %767 = vrot.lane.b32.xlu0 %v676, 48
        %v768 = vpop.permute.xlu0 %767
        %769 = vrot.lane.b32.xlu0 %v677, 48
        %v770 = vpop.permute.xlu0 %769
        %771 = vrot.lane.b32.xlu0 %v678, 48
        %v772 = vpop.permute.xlu0 %771
        %773 = vrot.lane.b32.xlu0 %v679, 48
        %v774 = vpop.permute.xlu0 %773
        %775 = vrot.lane.b32.xlu0 %v680, 48
        %v776 = vpop.permute.xlu0 %775
        %vm809 = vcmask 523648
        %810 = vst.msk [vmem:[#allocation2] sm:$0xff] %vm809, %v714
        %811 = vst.msk [vmem:[#allocation2 + $0x8] sm:$0xff] %vm809, %v716
        %812 = vst.msk [vmem:[#allocation2 + $0x10] sm:$0xff] %vm809, %v718
        %813 = vst.msk [vmem:[#allocation2 + $0x18] sm:$0xff] %vm809, %v720
        %814 = vst.msk [vmem:[#allocation2 + $0x20] sm:$0xff] %vm809, %v722
        %815 = vst.msk [vmem:[#allocation2 + $0x28] sm:$0xff] %vm809, %v724
        %816 = vst.msk [vmem:[#allocation2 + $0x30] sm:$0xff] %vm809, %v726
        %817 = vst.msk [vmem:[#allocation2 + $0x38] sm:$0xff] %vm809, %v728
        %818 = vst.msk [vmem:[#allocation2 + $0x40] sm:$0xff] %vm809, %v730
        %819 = vst.msk [vmem:[#allocation2 + $0x48] sm:$0xff] %vm809, %v732
        %820 = vst.msk [vmem:[#allocation2 + $0x50] sm:$0xff] %vm809, %v734
        %821 = vst.msk [vmem:[#allocation2 + $0x58] sm:$0xff] %vm809, %v736
        %822 = vst.msk [vmem:[#allocation2 + $0x60] sm:$0xff] %vm809, %v738
        %823 = vst.msk [vmem:[#allocation2 + $0x68] sm:$0xff] %vm809, %v740
        %824 = vst.msk [vmem:[#allocation2 + $0x70] sm:$0xff] %vm809, %v742
        %825 = vst.msk [vmem:[#allocation2 + $0x78] sm:$0xff] %vm809, %v744
        %826 = vst.msk [vmem:[#allocation2 + $0x80] sm:$0xff] %vm809, %v746
        %827 = vst.msk [vmem:[#allocation2 + $0x88] sm:$0xff] %vm809, %v748
        %828 = vst.msk [vmem:[#allocation2 + $0x90] sm:$0xff] %vm809, %v750
        %829 = vst.msk [vmem:[#allocation2 + $0x98] sm:$0xff] %vm809, %v752
        %830 = vst.msk [vmem:[#allocation2 + $0xa0] sm:$0xff] %vm809, %v754
        %831 = vst.msk [vmem:[#allocation2 + $0xa8] sm:$0xff] %vm809, %v756
        %832 = vst.msk [vmem:[#allocation2 + $0xb0] sm:$0xff] %vm809, %v758
        %833 = vst.msk [vmem:[#allocation2 + $0xb8] sm:$0xff] %vm809, %v760
        %834 = vst.msk [vmem:[#allocation2 + $0xc0] sm:$0xff] %vm809, %v762
        %835 = vst.msk [vmem:[#allocation2 + $0xc8] sm:$0xff] %vm809, %v764
        %836 = vst.msk [vmem:[#allocation2 + $0xd0] sm:$0xff] %vm809, %v766
        %837 = vst.msk [vmem:[#allocation2 + $0xd8] sm:$0xff] %vm809, %v768
        %838 = vst.msk [vmem:[#allocation2 + $0xe0] sm:$0xff] %vm809, %v770
        %839 = vst.msk [vmem:[#allocation2 + $0xe8] sm:$0xff] %vm809, %v772
        %840 = vst.msk [vmem:[#allocation2 + $0xf0] sm:$0xff] %vm809, %v774
        %841 = vst.msk [vmem:[#allocation2 + $0xf8] sm:$0xff] %vm809, %v776
        %v842 = vld [vmem:[%s0] sm:$0xff]
        %v843 = vld [vmem:[%s0 + $0x8] sm:$0xff]
        %v844 = vld [vmem:[%s0 + $0x10] sm:$0xff]
        %v845 = vld [vmem:[%s0 + $0x18] sm:$0xff]
        %v846 = vld [vmem:[%s0 + $0x20] sm:$0xff]
        %v847 = vld [vmem:[%s0 + $0x28] sm:$0xff]
        %v848 = vld [vmem:[%s0 + $0x30] sm:$0xff]
        %v849 = vld [vmem:[%s0 + $0x38] sm:$0xff]
        %v850 = vld [vmem:[%s0 + $0x40] sm:$0xff]
        %v851 = vld [vmem:[%s0 + $0x48] sm:$0xff]
        %v852 = vld [vmem:[#allocation2] sm:$0xff]
        %v853 = vld [vmem:[#allocation2 + $0x8] sm:$0xff]
        %v854 = vld [vmem:[#allocation2 + $0x10] sm:$0xff]
        %v855 = vld [vmem:[#allocation2 + $0x18] sm:$0xff]
        %v856 = vld [vmem:[#allocation2 + $0x20] sm:$0xff]
        %v857 = vld [vmem:[#allocation2 + $0x28] sm:$0xff]
        %v858 = vld [vmem:[#allocation2 + $0x30] sm:$0xff]
        %v859 = vld [vmem:[#allocation2 + $0x38] sm:$0xff]
        %v860 = vld [vmem:[#allocation2 + $0x40] sm:$0xff]
        %v861 = vld [vmem:[#allocation2 + $0x48] sm:$0xff]
        %v862 = vld [vmem:[#allocation2 + $0x50] sm:$0xff]
        %v863 = vld [vmem:[#allocation2 + $0x58] sm:$0xff]
        %v864 = vld [vmem:[#allocation2 + $0x60] sm:$0xff]
        %v865 = vld [vmem:[#allocation2 + $0x68] sm:$0xff]
        %v866 = vld [vmem:[#allocation2 + $0x70] sm:$0xff]
        %v867 = vld [vmem:[#allocation2 + $0x78] sm:$0xff]
        %v868 = vld [vmem:[#allocation2 + $0x80] sm:$0xff]
        %v869 = vld [vmem:[#allocation2 + $0x88] sm:$0xff]
        %v870 = vld [vmem:[#allocation2 + $0x90] sm:$0xff]
        %v871 = vld [vmem:[#allocation2 + $0x98] sm:$0xff]
        %v872 = vld [vmem:[#allocation2 + $0xa0] sm:$0xff]
        %v873 = vld [vmem:[#allocation2 + $0xa8] sm:$0xff]
        %v874 = vld [vmem:[#allocation2 + $0xb0] sm:$0xff]
        %v875 = vld [vmem:[#allocation2 + $0xb8] sm:$0xff]
        %v876 = vld [vmem:[#allocation2 + $0xc0] sm:$0xff]
        %v877 = vld [vmem:[#allocation2 + $0xc8] sm:$0xff]
        %v878 = vld [vmem:[#allocation2 + $0xd0] sm:$0xff]
        %v879 = vld [vmem:[#allocation2 + $0xd8] sm:$0xff]
        %v880 = vld [vmem:[#allocation2 + $0xe0] sm:$0xff]
        %v881 = vld [vmem:[#allocation2 + $0xe8] sm:$0xff]
        %v882 = vld [vmem:[#allocation2 + $0xf0] sm:$0xff]
        %v883 = vld [vmem:[#allocation2 + $0xf8] sm:$0xff]
        %vm884 = vcmask 523264
        %v886 = vsel %vm884, %v842, 0
        %v889 = vsel %vm884, %v843, 0
        %v892 = vsel %vm884, %v844, 0
        %v895 = vsel %vm884, %v845, 0
        %v898 = vsel %vm884, %v846, 0
        %v901 = vsel %vm884, %v847, 0
        %v904 = vsel %vm884, %v848, 0
        %v907 = vsel %vm884, %v849, 0
        %v910 = vsel %vm884, %v850, 0
        %v913 = vsel %vm884, %v851, 0
        %v916 = vsel %vm884, %v852, 0
        %v919 = vsel %vm884, %v853, 0
        %v922 = vsel %vm884, %v854, 0
        %v925 = vsel %vm884, %v855, 0
        %v928 = vsel %vm884, %v856, 0
        %v931 = vsel %vm884, %v857, 0
        %v934 = vsel %vm884, %v858, 0
        %v937 = vsel %vm884, %v859, 0
        %v940 = vsel %vm884, %v860, 0
        %v943 = vsel %vm884, %v861, 0
        %v946 = vsel %vm884, %v862, 0
        %v949 = vsel %vm884, %v863, 0
        %v952 = vsel %vm884, %v864, 0
        %v955 = vsel %vm884, %v865, 0
        %v958 = vsel %vm884, %v866, 0
        %v961 = vsel %vm884, %v867, 0
        %v964 = vsel %vm884, %v868, 0
        %v967 = vsel %vm884, %v869, 0
        %v970 = vsel %vm884, %v870, 0
        %v973 = vsel %vm884, %v871, 0
        %v976 = vsel %vm884, %v872, 0
        %v979 = vsel %vm884, %v873, 0
        %v982 = vsel %vm884, %v874, 0
        %v985 = vsel %vm884, %v875, 0
        %v988 = vsel %vm884, %v876, 0
        %v991 = vsel %vm884, %v877, 0
        %v994 = vsel %vm884, %v878, 0
        %v997 = vsel %vm884, %v879, 0
        %v1000 = vsel %vm884, %v880, 0
        %v1003 = vsel %vm884, %v881, 0
        %v1006 = vsel %vm884, %v882, 0
        %v1009 = vsel %vm884, %v883, 0
        %1011 = vmatprep.subr.mxu0 0.0
        %1012 = vmatpush1.xpose.msra.mxu0 %v916
        %1013 = vmatprep.subr.mxu0 0.0
        %1014 = vmatpush1.xpose.msra.mxu0 %v919
        %1015 = vmatprep.subr.mxu0 0.0
        %1016 = vmatpush1.xpose.msra.mxu0 %v922
        %1017 = vmatprep.subr.mxu0 0.0
        %1018 = vmatpush1.xpose.msra.mxu0 %v925
        %1019 = vmatprep.subr.mxu0 0.0
        %1020 = vmatpush1.xpose.msra.mxu0 %v928
        %1021 = vmatprep.subr.mxu0 0.0
        %1022 = vmatpush1.xpose.msra.mxu0 %v931
        %1023 = vmatprep.subr.mxu0 0.0
        %1024 = vmatpush1.xpose.msra.mxu0 %v934
        %1025 = vmatprep.subr.mxu0 0.0
        %1026 = vmatpush1.xpose.msra.mxu0 %v937
        %1027 = vmatprep.subr.mxu0 0.0
        %1028 = vmatpush1.xpose.msra.mxu0 %v940
        %1029 = vmatprep.subr.mxu0 0.0
        %1030 = vmatpush1.xpose.msra.mxu0 %v943
        %1031 = vmatprep.subr.mxu0 0.0
        %1032 = vmatpush1.xpose.msra.mxu0 %v946
        %1033 = vmatprep.subr.mxu0 0.0
        %1034 = vmatpush1.xpose.msra.mxu0 %v949
        %1035 = vmatprep.subr.mxu0 0.0
        %1036 = vmatpush1.xpose.msra.mxu0 %v952
        %1037 = vmatprep.subr.mxu0 0.0
        %1038 = vmatpush1.xpose.msra.mxu0 %v955
        %1039 = vmatprep.subr.mxu0 0.0
        %1040 = vmatpush1.xpose.msra.mxu0 %v958
        %1041 = vmatprep.subr.mxu0 0.0
        %1042 = vmatpush1.xpose.msra.mxu0 %v961
        %1043 = vmatprep.subr.mxu0 0.0
        %1044 = vmatpush1.xpose.msra.mxu0 %v964
        %1045 = vmatprep.subr.mxu0 0.0
        %1046 = vmatpush1.xpose.msra.mxu0 %v967
        %1047 = vmatprep.subr.mxu0 0.0
        %1048 = vmatpush1.xpose.msra.mxu0 %v970
        %1049 = vmatprep.subr.mxu0 0.0
        %1050 = vmatpush1.xpose.msra.mxu0 %v973
        %1051 = vmatprep.subr.mxu0 0.0
        %1052 = vmatpush1.xpose.msra.mxu0 %v976
        %1053 = vmatprep.subr.mxu0 0.0
        %1054 = vmatpush1.xpose.msra.mxu0 %v979
        %1055 = vmatprep.subr.mxu0 0.0
        %1056 = vmatpush1.xpose.msra.mxu0 %v982
        %1057 = vmatprep.subr.mxu0 0.0
        %1058 = vmatpush1.xpose.msra.mxu0 %v985
        %1059 = vmatprep.subr.mxu0 0.0
        %1060 = vmatpush1.xpose.msra.mxu0 %v988
        %1061 = vmatprep.subr.mxu0 0.0
        %1062 = vmatpush1.xpose.msra.mxu0 %v991
        %1063 = vmatprep.subr.mxu0 0.0
        %1064 = vmatpush1.xpose.msra.mxu0 %v994
        %1065 = vmatprep.subr.mxu0 0.0
        %1066 = vmatpush1.xpose.msra.mxu0 %v997
        %1067 = vmatprep.subr.mxu0 0.0
        %1068 = vmatpush1.xpose.msra.mxu0 %v1000
        %1069 = vmatprep.subr.mxu0 0.0
        %1070 = vmatpush1.xpose.msra.mxu0 %v1003
        %1071 = vmatprep.subr.mxu0 0.0
        %1072 = vmatpush1.xpose.msra.mxu0 %v1006
        %1073 = vmatprep.subr.mxu0 0.0
        %1074 = vmatpush1.xpose.msra.mxu0 %v1009
        %1075 = vmatprep.mubr.f32.mxu0 0.0
        %1076 = vmatmul.mubr.f32.gmra.mrb[0].mxu0 %v886
        %v1077 = vpop.f32.mrb[0].mxu0
        %v1078 = vadd.f32 0.0, %v1077
        %v1079 = vpop.f32.mrb[0].mxu0
        %v1080 = vadd.f32 0.0, %v1079
        %1081 = vmatprep.mubr.f32.mxu0 0.0
        %1082 = vmatmul.mubr.f32.gmra.mrb[0].mxu0 %v889
        %v1083 = vpop.f32.mrb[0].mxu0
        %v1084 = vadd.f32 0.0, %v1083
        %v1085 = vpop.f32.mrb[0].mxu0
        %v1086 = vadd.f32 0.0, %v1085
        %1087 = vmatprep.mubr.f32.mxu0 0.0
        %1088 = vmatmul.mubr.f32.gmra.mrb[0].mxu0 %v892
        %v1089 = vpop.f32.mrb[0].mxu0
        %v1090 = vadd.f32 0.0, %v1089
        %v1091 = vpop.f32.mrb[0].mxu0
        %v1092 = vadd.f32 0.0, %v1091
        %1093 = vmatprep.mubr.f32.mxu0 0.0
        %1094 = vmatmul.mubr.f32.gmra.mrb[0].mxu0 %v895
        %v1095 = vpop.f32.mrb[0].mxu0
        %v1096 = vadd.f32 0.0, %v1095
        %v1097 = vpop.f32.mrb[0].mxu0
        %v1098 = vadd.f32 0.0, %v1097
        %1099 = vmatprep.mubr.f32.mxu0 0.0
        %1100 = vmatmul.mubr.f32.gmra.mrb[0].mxu0 %v898
        %v1101 = vpop.f32.mrb[0].mxu0
        %v1102 = vadd.f32 0.0, %v1101
        %v1103 = vpop.f32.mrb[0].mxu0
        %v1104 = vadd.f32 0.0, %v1103
        %1105 = vmatprep.mubr.f32.mxu0 0.0
        %1106 = vmatmul.mubr.f32.gmra.mrb[0].mxu0 %v901
        %v1107 = vpop.f32.mrb[0].mxu0
        %v1108 = vadd.f32 0.0, %v1107
        %v1109 = vpop.f32.mrb[0].mxu0
        %v1110 = vadd.f32 0.0, %v1109
        %1111 = vmatprep.mubr.f32.mxu0 0.0
        %1112 = vmatmul.mubr.f32.gmra.mrb[0].mxu0 %v904
        %v1113 = vpop.f32.mrb[0].mxu0
        %v1114 = vadd.f32 0.0, %v1113
        %v1115 = vpop.f32.mrb[0].mxu0
        %v1116 = vadd.f32 0.0, %v1115
        %1117 = vmatprep.mubr.f32.mxu0 0.0
        %1118 = vmatmul.mubr.f32.gmra.mrb[0].mxu0 %v907
        %v1119 = vpop.f32.mrb[0].mxu0
        %v1120 = vadd.f32 0.0, %v1119
        %v1121 = vpop.f32.mrb[0].mxu0
        %v1122 = vadd.f32 0.0, %v1121
        %1123 = vmatprep.mubr.f32.mxu0 0.0
        %1124 = vmatmul.mubr.f32.gmra.mrb[0].mxu0 %v910
        %v1125 = vpop.f32.mrb[0].mxu0
        %v1126 = vadd.f32 0.0, %v1125
        %v1127 = vpop.f32.mrb[0].mxu0
        %v1128 = vadd.f32 0.0, %v1127
        %1129 = vmatprep.mubr.f32.mxu0 0.0
        %1130 = vmatmul.mubr.f32.gmra.mrb[0].mxu0 %v913
        %v1131 = vpop.f32.mrb[0].mxu0
        %v1132 = vadd.f32 0.0, %v1131
        %v1133 = vpop.f32.mrb[0].mxu0
        %v1134 = vadd.f32 0.0, %v1133
        %1135 = vdwg.mxu0
        %v1136 = vmul.f32 %v1078, %v1078
        %v1137 = vmul.f32 %v1080, %v1080
        %v1138 = vmul.f32 %v1084, %v1084
        %v1139 = vmul.f32 %v1086, %v1086
        %v1140 = vmul.f32 %v1090, %v1090
        %v1141 = vmul.f32 %v1092, %v1092
        %v1142 = vmul.f32 %v1096, %v1096
        %v1143 = vmul.f32 %v1098, %v1098
        %v1144 = vmul.f32 %v1102, %v1102
        %v1145 = vmul.f32 %v1104, %v1104
        %v1146 = vmul.f32 %v1108, %v1108
        %v1147 = vmul.f32 %v1110, %v1110
        %v1148 = vmul.f32 %v1114, %v1114
        %v1149 = vmul.f32 %v1116, %v1116
        %v1150 = vmul.f32 %v1120, %v1120
        %v1151 = vmul.f32 %v1122, %v1122
        %v1152 = vmul.f32 %v1126, %v1126
        %v1153 = vmul.f32 %v1128, %v1128
        %v1154 = vmul.f32 %v1132, %v1132
        %v1155 = vmul.f32 %v1134, %v1134
        %v1156 = vadd.f32 %v1136, %v1146
        %v1157 = vadd.f32 %v1137, %v1147
        %v1158 = vadd.f32 %v1138, %v1148
        %v1159 = vadd.f32 %v1139, %v1149
        %v1160 = vadd.f32 %v1140, %v1150
        %v1161 = vadd.f32 %v1141, %v1151
        %v1162 = vadd.f32 %v1142, %v1152
        %v1163 = vadd.f32 %v1143, %v1153
        %v1164 = vadd.f32 %v1144, %v1154
        %v1165 = vadd.f32 %v1145, %v1155
        %v1166 = vld [vmem:[%s1] sm:$0xff]
        %v1167 = vld [vmem:[%s1 + $0x8] sm:$0xff]
        %v1168 = vld [vmem:[%s1 + $0x10] sm:$0xff]
        %v1169 = vld [vmem:[%s1 + $0x18] sm:$0xff]
        %vm1170 = vcmask 326656
        %v1172 = vsel %vm1170, %v1166, 0
        %v1175 = vsel %vm1170, %v1167, 0
        %v1178 = vsel %vm1170, %v1168, 0
        %v1181 = vsel %vm1170, %v1169, 0
        %1183 = vmatprep.subr.mxu0 %v1157
        %1184 = vmatpush1.msra.mxu0 %v1156
        %1185 = vmatprep.subr.mxu0 %v1159
        %1186 = vmatpush1.msra.mxu0 %v1158
        %1187 = vmatprep.subr.mxu0 %v1161
        %1188 = vmatpush1.msra.mxu0 %v1160
        %1189 = vmatprep.subr.mxu0 %v1163
        %1190 = vmatpush1.msra.mxu0 %v1162
        %1191 = vmatprep.subr.mxu0 %v1165
        %1192 = vmatpush1.msra.mxu0 %v1164
        %1193 = vmatprep.subr.mxu0 0.0
        %1194 = vmatpush1.msra.mxu0 0.0
        %1195 = vmatprep.subr.mxu0 0.0
        %1196 = vmatpush1.msra.mxu0 0.0
        %1197 = vmatprep.subr.mxu0 0.0
        %1198 = vmatpush1.msra.mxu0 0.0
        %1199 = vmatprep.subr.mxu0 0.0
        %1200 = vmatpush1.msra.mxu0 0.0
        %1201 = vmatprep.subr.mxu0 0.0
        %1202 = vmatpush1.msra.mxu0 0.0
        %1203 = vmatprep.subr.mxu0 0.0
        %1204 = vmatpush1.msra.mxu0 0.0
        %1205 = vmatprep.subr.mxu0 0.0
        %1206 = vmatpush1.msra.mxu0 0.0
        %1207 = vmatprep.subr.mxu0 0.0
        %1208 = vmatpush1.msra.mxu0 0.0
        %1209 = vmatprep.subr.mxu0 0.0
        %1210 = vmatpush1.msra.mxu0 0.0
        %1211 = vmatprep.subr.mxu0 0.0
        %1212 = vmatpush1.msra.mxu0 0.0
        %1213 = vmatprep.subr.mxu0 0.0
        %1214 = vmatpush1.msra.mxu0 0.0
        %1215 = vmatprep.subr.mxu0 0.0
        %1216 = vmatpush1.msra.mxu0 0.0
        %1217 = vmatprep.subr.mxu0 0.0
        %1218 = vmatpush1.msra.mxu0 0.0
        %1219 = vmatprep.subr.mxu0 0.0
        %1220 = vmatpush1.msra.mxu0 0.0
        %1221 = vmatprep.subr.mxu0 0.0
        %1222 = vmatpush1.msra.mxu0 0.0
        %1223 = vmatprep.subr.mxu0 0.0
        %1224 = vmatpush1.msra.mxu0 0.0
        %1225 = vmatprep.subr.mxu0 0.0
        %1226 = vmatpush1.msra.mxu0 0.0
        %1227 = vmatprep.subr.mxu0 0.0
        %1228 = vmatpush1.msra.mxu0 0.0
        %1229 = vmatprep.subr.mxu0 0.0
        %1230 = vmatpush1.msra.mxu0 0.0
        %1231 = vmatprep.subr.mxu0 0.0
        %1232 = vmatpush1.msra.mxu0 0.0
        %1233 = vmatprep.subr.mxu0 0.0
        %1234 = vmatpush1.msra.mxu0 0.0
        %1235 = vmatprep.subr.mxu0 0.0
        %1236 = vmatpush1.msra.mxu0 0.0
        %1237 = vmatprep.subr.mxu0 0.0
        %1238 = vmatpush1.msra.mxu0 0.0
        %1239 = vmatprep.subr.mxu0 0.0
        %1240 = vmatpush1.msra.mxu0 0.0
        %1241 = vmatprep.subr.mxu0 0.0
        %1242 = vmatpush1.msra.mxu0 0.0
        %1243 = vmatprep.subr.mxu0 0.0
        %1244 = vmatpush1.msra.mxu0 0.0
        %1245 = vmatprep.subr.mxu0 0.0
        %1246 = vmatpush1.msra.mxu0 0.0
        %1247 = vmatprep.mubr.f32.mxu0 0.0
        %1248 = vmatmul.mubr.f32.gmra.mrb[0].mxu0 %v1172
        %v1249 = vpop.f32.mrb[0].mxu0
        %v1250 = vadd.f32 0.0, %v1249
        %v1251 = vpop.f32.mrb[0].mxu0
        %v1252 = vadd.f32 0.0, %v1251
        %1253 = vmatprep.mubr.f32.mxu0 0.0
        %1254 = vmatmul.mubr.f32.gmra.mrb[0].mxu0 %v1175
        %v1255 = vpop.f32.mrb[0].mxu0
        %v1256 = vadd.f32 0.0, %v1255
        %v1257 = vpop.f32.mrb[0].mxu0
        %v1258 = vadd.f32 0.0, %v1257
        %1259 = vmatprep.mubr.f32.mxu0 0.0
        %1260 = vmatmul.mubr.f32.gmra.mrb[0].mxu0 %v1178
        %v1261 = vpop.f32.mrb[0].mxu0
        %v1262 = vadd.f32 0.0, %v1261
        %v1263 = vpop.f32.mrb[0].mxu0
        %v1264 = vadd.f32 0.0, %v1263
        %1265 = vmatprep.mubr.f32.mxu0 0.0
        %1266 = vmatmul.mubr.f32.gmra.mrb[0].mxu0 %v1181
        %v1267 = vpop.f32.mrb[0].mxu0
        %v1268 = vadd.f32 0.0, %v1267
        %v1269 = vpop.f32.mrb[0].mxu0
        %v1270 = vadd.f32 0.0, %v1269
        %1271 = vdwg.mxu0
        %1272 = vst [vmem:[%s187] sm:$0xff] %v1250
        %1273 = vst [vmem:[%s187 + $0x8] sm:$0xff] %v1252
        %1274 = vst [vmem:[%s187 + $0x10] sm:$0xff] %v1256
        %1275 = vst [vmem:[%s187 + $0x18] sm:$0xff] %v1258
        %1276 = vst [vmem:[%s187 + $0x20] sm:$0xff] %v1262
        %1277 = vst [vmem:[%s187 + $0x28] sm:$0xff] %v1264
        %1278 = vst [vmem:[%s187 + $0x30] sm:$0xff] %v1268
        %1279 = vst [vmem:[%s187 + $0x38] sm:$0xff] %v1270
        %s1280 = sand.u32 %s109, 1
        %s1281 = scalar_lea.sflag [#allocation4], %s1280
        %s1282 = sand.u32 %s109, 1
        %s1283 = smul.addr %s1282, 64
        %s1284 = scalar_lea.vmem [#allocation3], %s1283
        // Predicated region
        $region33: #{tpu_custom_call.1} parent=31 // pred_check
          %p1285 = pneg %p119
        $region34: #{tpu_custom_call.1} parent=31 // pred_check_branch
          %1287 = sbr.rel (%p1285) target = $region36
        $region35: #{tpu_custom_call.1} parent=31 // pred_region
          %s1288 = smul.u32 2, %s22
          %s1290 = ssub.s32 1024, 1024
          %1291 = vsyncadd %s1281, %s1290
          %s1292 = smul.addr %s21, 8
          %s1293 = sadd.s32 %s1288, %s1292
          %s1294 = smul.addr %s1293, 128
          %s1295 = scalar_lea.hbm %s3, %s1294
          %s1296 = sshll.u32 %s1284, 4
          %s1297 = int_to_ptr.vmem [resolvable:$true] %s1296
          %1302 = dma.vmem_to_hbm [thread:$0]  %s1297, 1024, %s1295, %s1281, 256, 256, 16
        $region36: #{tpu_custom_call.1} parent=31 // pred_fallthru
          _
      $region32: #{tpu_custom_call.1} parent=5 // pred_fallthru
        _
      %p1303 = scmp.le.s32.totalorder 2, %s12
      // Predicated region
      $region37: #{tpu_custom_call.1} parent=5 // pred_check
        %p1304 = pneg %p1303
      $region38: #{tpu_custom_call.1} parent=5 // pred_check_branch
        %1306 = sbr.rel (%p1304) target = $region40
      $region39: #{tpu_custom_call.1} parent=5 // pred_region
        %s1307 = ssub.s32 %s12, 2
        // Predicated region
        $region41: #{tpu_custom_call.1} parent=39 // pred_check
          %p1308 = pneg %p125
        $region42: #{tpu_custom_call.1} parent=39 // pred_check_branch
          %1310 = sbr.rel (%p1308) target = $region44
        $region43: #{tpu_custom_call.1} parent=39 // pred_region
          %s1311 = sand.u32 %s110, 1
          %s1312 = scalar_lea.sflag [#allocation4], %s1311
          %s1313 = sand.u32 %s110, 1
          %s1314 = smul.addr %s1313, 64
          %s1315 = scalar_lea.vmem [#allocation3], %s1314
          %1316 = dma.done %s1312, 1024
        $region44: #{tpu_custom_call.1} parent=39 // pred_fallthru
          _
      $region40: #{tpu_custom_call.1} parent=5 // pred_fallthru
        _
    $region6: #{tpu_custom_call.1} parent=1 // loop_footer
      %s16 = sadd.s32 1, %s12
    $region7: #{tpu_custom_call.1} parent=1 // loop_footer_branch
      %11 = sbr.rel target = $region3
    $region8: #{tpu_custom_call.1} parent=1 // loop_exit
      _
    %1317 = vsyncpa [#allocation4], 1
    %s1318 = scalar_lea.sflag [#allocation4], 1
    %1319 = vsyncpa %s1318, 1

</llo_original>
